<compile_context>
chip_gen: v7x
topology: tpu7x:2x2x1
jax: 0.10.0
libtpu: 0.0.40
codegen_flags: <defaults>
</compile_context>

<pallas_src>
import functools

import jax
import jax.numpy as jnp
from jax.experimental import pallas as pl
from jax.experimental.pallas import tpu as pltpu


def _kd_loss_kernel(t_ref, s_ref, y_ref, out_ref, acc_ref, *, T, alpha,
                    n_valid, tile_n):
    j = pl.program_id(0)

    @pl.when(j == 0)
    def _():
        acc_ref[...] = jnp.zeros_like(acc_ref)

    t = t_ref[...].astype(jnp.float32)
    s = s_ref[...].astype(jnp.float32)
    y = y_ref[...]                                   # (tile_n, 1) int32
    tn, c = t.shape

    # Row-validity mask: rows >= n_valid are batch padding and contribute 0.
    row = j * tile_n + jax.lax.broadcasted_iota(jnp.int32, (tn, 1), 0)
    valid = (row < n_valid).astype(jnp.float32)      # (tile_n, 1)

    inv_T = jnp.float32(1.0 / T)

    # Teacher softmax / log-softmax at temperature T (numerically stable).
    tT = t * inv_T
    tT = tT - jnp.max(tT, axis=1, keepdims=True)
    et = jnp.exp(tT)
    zt = jnp.sum(et, axis=1, keepdims=True)
    log_p = tT - jnp.log(zt)
    p = et * pl.reciprocal(zt)                       # exact reciprocal

    # Student log-softmax at temperature T (stable).
    sT = s * inv_T
    sT = sT - jnp.max(sT, axis=1, keepdims=True)
    log_q = sT - jnp.log(jnp.sum(jnp.exp(sT), axis=1, keepdims=True))

    # Per-row KL contribution: sum_c p * (log p - log q).
    kl_rows = jnp.sum(p * (log_p - log_q), axis=1, keepdims=True)

    # Per-row CE on untempered student logits: logsumexp(s) - s[:, y].
    m_s = jnp.max(s, axis=1, keepdims=True)
    lse = m_s + jnp.log(jnp.sum(jnp.exp(s - m_s), axis=1, keepdims=True))
    cls = jax.lax.broadcasted_iota(jnp.int32, (tn, c), 1)
    s_y = jnp.sum(jnp.where(cls == y, s, 0.0), axis=1, keepdims=True)
    ce_rows = lse - s_y

    w_kl = jnp.float32(alpha * T * T / n_valid)      # KLDiv(batchmean) * alpha*T^2
    w_ce = jnp.float32((1.0 - alpha) / n_valid)      # CE(mean) * (1 - alpha)
    contrib = jnp.sum(valid * (kl_rows * w_kl + ce_rows * w_ce),
                      axis=0, keepdims=True)         # (1, 1)
    acc_ref[...] += contrib

    @pl.when(j == pl.num_programs(0) - 1)
    def _():
        out_ref[...] = acc_ref[...]


def _round_up(x, m):
    return (x + m - 1) // m * m


def kd_loss(t_preds, s_preds, truth, *, temperature=20.0, alpha=0.3,
            tile_rows=None):
    """KD_loss forward: t_preds, s_preds (N, C) float (f32 or bf16); truth (N,) int."""
    n, c = t_preds.shape
    assert s_preds.shape == (n, c)
    assert truth.shape == (n,)

    itemsize = jnp.dtype(t_preds.dtype).itemsize

    # Tile the batch axis. ~2 MiB (f32-equivalent) per logits tile keeps the
    # double-buffered working set small even under v7x's 64 MiB VMEM while
    # amortizing the ~0.35 us per-grid-step overhead.
    n_pad8 = _round_up(n, 8)
    if tile_rows is None:
        tile_n = (2 * 1024 * 1024) // max(1, c * 4)
        tile_n = max(8, min(1024, (tile_n // 8) * 8))
    else:
        tile_n = max(8, _round_up(int(tile_rows), 8))
    tile_n = min(tile_n, n_pad8)
    num_tiles = -(-n_pad8 // tile_n)
    n_pad = num_tiles * tile_n

    if n_pad != n:
        pad = n_pad - n
        t_preds = jnp.pad(t_preds, ((0, pad), (0, 0)))
        s_preds = jnp.pad(s_preds, ((0, pad), (0, 0)))
        truth = jnp.pad(truth, ((0, pad),))
    y = truth.astype(jnp.int32).reshape(n_pad, 1)

    kernel = functools.partial(
        _kd_loss_kernel, T=float(temperature), alpha=float(alpha),
        n_valid=n, tile_n=tile_n)

    # VMEM budget: 2 logit inputs x 2 pipeline buffers + f32 temporaries + slack.
    f32_tile = tile_n * c * 4
    in_tile = tile_n * c * itemsize
    vmem_bytes = 4 * in_tile + 10 * f32_tile + (1 << 20)
    vmem_bytes = int(min(max(vmem_bytes, 32 << 20), 60 << 20))

    out = pl.pallas_call(
        kernel,
        out_shape=jax.ShapeDtypeStruct((1, 1), jnp.float32),
        grid=(num_tiles,),
        in_specs=[
            pl.BlockSpec((tile_n, c), lambda i: (i, 0)),
            pl.BlockSpec((tile_n, c), lambda i: (i, 0)),
            pl.BlockSpec((tile_n, 1), lambda i: (i, 0)),
        ],
        out_specs=pl.BlockSpec((1, 1), lambda i: (0, 0)),
        scratch_shapes=[pltpu.VMEM((1, 1), jnp.float32)],
        compiler_params=pltpu.CompilerParams(
            dimension_semantics=("arbitrary",),
            vmem_limit_bytes=vmem_bytes,
        ),
    )(t_preds, s_preds, y)
    return out[0, 0]


def _kd_loss_ref(t_preds, s_preds, truth, *, temperature=20.0, alpha=0.3):
    # Pure-JAX reference mirroring the PyTorch module.
    T = temperature
    t_preds = t_preds.astype(jnp.float32)
    s_preds = s_preds.astype(jnp.float32)
    log_q = jax.nn.log_softmax(s_preds / T, axis=1)
    p = jax.nn.softmax(t_preds / T, axis=1)
    log_p = jax.nn.log_softmax(t_preds / T, axis=1)
    kl = jnp.sum(p * (log_p - log_q)) / t_preds.shape[0]
    log_sm = jax.nn.log_softmax(s_preds, axis=1)
    ce = -jnp.mean(jnp.take_along_axis(log_sm, truth[:, None], axis=1))
    return kl * (alpha * T * T) + ce * (1.0 - alpha)


if __name__ == "__main__":
    key = jax.random.PRNGKey(0)
    k1, k2, k3 = jax.random.split(key, 3)

    # Small shapes consistent with the module (batch=8, classes=9).
    N, C = 8, 9
    t_preds = jax.random.normal(k1, (N, C), dtype=jnp.float32)
    s_preds = jax.random.normal(k2, (N, C), dtype=jnp.float32)
    truth = jax.random.randint(k3, (N,), 0, C, dtype=jnp.int32)

    out = kd_loss(t_preds, s_preds, truth, temperature=20.0, alpha=0.3)
    out = jax.block_until_ready(out)
    ref = _kd_loss_ref(t_preds, s_preds, truth, temperature=20.0, alpha=0.3)
    assert jnp.allclose(out, ref, rtol=1e-5, atol=1e-5), (out, ref)

    # Second check: batch not a multiple of the tile and a forced small tile,
    # exercising the grid accumulator + padding mask paths.
    N2 = 300
    k4, k5, k6 = jax.random.split(jax.random.PRNGKey(1), 3)
    t2 = jax.random.normal(k4, (N2, C), dtype=jnp.float32)
    s2 = jax.random.normal(k5, (N2, C), dtype=jnp.float32)
    y2 = jax.random.randint(k6, (N2,), 0, C, dtype=jnp.int32)
    out2 = jax.block_until_ready(kd_loss(t2, s2, y2, tile_rows=64))
    ref2 = _kd_loss_ref(t2, s2, y2)
    assert jnp.allclose(out2, ref2, rtol=1e-4, atol=1e-4), (out2, ref2)

    print("KERNEL_OK")
</pallas_src>

<mosaic_0001>
module attributes {stable_mosaic.version = 11 : i64} {
  func.func @_kd_loss_kernel(%arg0: i32, %arg1: memref<8x9xf32, #tpu.memory_space<vmem>>, %arg2: memref<8x9xf32, #tpu.memory_space<vmem>>, %arg3: memref<8x1xi32, #tpu.memory_space<vmem>>, %arg4: memref<1x1xf32, #tpu.memory_space<vmem>>, %arg5: memref<1x1xf32, #tpu.memory_space<vmem>>) attributes {dimension_semantics = [#tpu.dimension_semantics<arbitrary>], iteration_bounds = array<i64: 1>, scalar_prefetch = 0 : i64, scratch_operands = 1 : i64, tpu.core_type = #tpu.core_type<tc>, window_params = [{transform_indices = @transform_0, window_bounds = array<i64: 8, 9>}, {transform_indices = @transform_1, window_bounds = array<i64: 8, 9>}, {transform_indices = @transform_2, window_bounds = array<i64: 8, 1>}, {pipeline_mode = #tpu.pipeline_mode<synchronous>, transform_indices = @transform_3, window_bounds = array<i64: 1, 1>}]} {
    %c0_i32 = arith.constant 0 : i32
    %0 = arith.cmpi eq, %arg0, %c0_i32 : i32
    %1 = arith.extui %0 : i1 to i32
    %c0_i32_0 = arith.constant 0 : i32
    %2 = arith.cmpi ne, %1, %c0_i32_0 : i32
    scf.if %2 {
      %cst_26 = arith.constant 0.000000e+00 : f32
      %76 = vector.broadcast %cst_26 : f32 to vector<1x1xf32>
      %c0_27 = arith.constant 0 : index
      %c0_28 = arith.constant 0 : index
      %77 = vector.load %arg5[%c0_27, %c0_28] : memref<1x1xf32, #tpu.memory_space<vmem>>, vector<1x1xf32>
      tpu.vector_store %arg5[%c0_27, %c0_28], %76 {strides = array<i32>} : memref<1x1xf32, #tpu.memory_space<vmem>>, vector<1x1xf32>,
    } else {
    }
    %c0 = arith.constant 0 : index
    %c0_1 = arith.constant 0 : index
    %3 = vector.load %arg1[%c0, %c0_1] : memref<8x9xf32, #tpu.memory_space<vmem>>, vector<8x9xf32>
    %c0_2 = arith.constant 0 : index
    %c0_3 = arith.constant 0 : index
    %4 = vector.load %arg2[%c0_2, %c0_3] : memref<8x9xf32, #tpu.memory_space<vmem>>, vector<8x9xf32>
    %c0_4 = arith.constant 0 : index
    %c0_5 = arith.constant 0 : index
    %5 = vector.load %arg3[%c0_4, %c0_5] : memref<8x1xi32, #tpu.memory_space<vmem>>, vector<8x1xi32>
    %c8_i32 = arith.constant 8 : i32
    %6 = arith.muli %arg0, %c8_i32 : i32
    %7 = tpu.iota {dimensions = array<i32: 0>} : vector<8x1xi32>
    %8 = vector.broadcast %6 : i32 to vector<8x1xi32>
    %9 = arith.addi %8, %7 : vector<8x1xi32>
    %c8_i32_6 = arith.constant 8 : i32
    %10 = vector.broadcast %c8_i32_6 : i32 to vector<8x1xi32>
    %11 = arith.cmpi slt, %9, %10 : vector<8x1xi32>
    %12 = arith.extui %11 : vector<8x1xi1> to vector<8x1xi32>
    %13 = arith.sitofp %12 : vector<8x1xi32> to vector<8x1xf32>
    %cst = arith.constant 5.000000e-02 : f32
    %14 = vector.broadcast %cst : f32 to vector<8x9xf32>
    %15 = arith.mulf %3, %14 : vector<8x9xf32>
    %cst_7 = arith.constant dense<0xFF800000> : vector<8xf32>
    %16 = vector.multi_reduction <maximumf>, %15, %cst_7 [1] : vector<8x9xf32> to vector<8xf32>
    %17 = vector.shape_cast %16 : vector<8xf32> to vector<8x1xf32>
    %18 = vector.broadcast %17 : vector<8x1xf32> to vector<8x9xf32>
    %19 = arith.subf %15, %18 : vector<8x9xf32>
    %20 = math.exp %19 : vector<8x9xf32>
    %cst_8 = arith.constant dense<0.000000e+00> : vector<8xf32>
    %21 = vector.multi_reduction <add>, %20, %cst_8 [1] : vector<8x9xf32> to vector<8xf32>
    %22 = vector.shape_cast %21 : vector<8xf32> to vector<8x1xf32>
    %23 = math.log %22 : vector<8x1xf32>
    %24 = vector.broadcast %23 : vector<8x1xf32> to vector<8x9xf32>
    %25 = arith.subf %19, %24 : vector<8x9xf32>
    %26 = tpu.reciprocal %22 : vector<8x1xf32> -> vector<8x1xf32>
    %27 = vector.broadcast %26 : vector<8x1xf32> to vector<8x9xf32>
    %28 = arith.mulf %20, %27 : vector<8x9xf32>
    %cst_9 = arith.constant 5.000000e-02 : f32
    %29 = vector.broadcast %cst_9 : f32 to vector<8x9xf32>
    %30 = arith.mulf %4, %29 : vector<8x9xf32>
    %cst_10 = arith.constant dense<0xFF800000> : vector<8xf32>
    %31 = vector.multi_reduction <maximumf>, %30, %cst_10 [1] : vector<8x9xf32> to vector<8xf32>
    %32 = vector.shape_cast %31 : vector<8xf32> to vector<8x1xf32>
    %33 = vector.broadcast %32 : vector<8x1xf32> to vector<8x9xf32>
    %34 = arith.subf %30, %33 : vector<8x9xf32>
    %35 = math.exp %34 : vector<8x9xf32>
    %cst_11 = arith.constant dense<0.000000e+00> : vector<8xf32>
    %36 = vector.multi_reduction <add>, %35, %cst_11 [1] : vector<8x9xf32> to vector<8xf32>
    %37 = vector.shape_cast %36 : vector<8xf32> to vector<8x1xf32>
    %38 = math.log %37 : vector<8x1xf32>
    %39 = vector.broadcast %38 : vector<8x1xf32> to vector<8x9xf32>
    %40 = arith.subf %34, %39 : vector<8x9xf32>
    %41 = arith.subf %25, %40 : vector<8x9xf32>
    %42 = arith.mulf %28, %41 : vector<8x9xf32>
    %cst_12 = arith.constant dense<0.000000e+00> : vector<8xf32>
    %43 = vector.multi_reduction <add>, %42, %cst_12 [1] : vector<8x9xf32> to vector<8xf32>
    %44 = vector.shape_cast %43 : vector<8xf32> to vector<8x1xf32>
    %cst_13 = arith.constant dense<0xFF800000> : vector<8xf32>
    %45 = vector.multi_reduction <maximumf>, %4, %cst_13 [1] : vector<8x9xf32> to vector<8xf32>
    %46 = vector.shape_cast %45 : vector<8xf32> to vector<8x1xf32>
    %47 = vector.broadcast %46 : vector<8x1xf32> to vector<8x9xf32>
    %48 = arith.subf %4, %47 : vector<8x9xf32>
    %49 = math.exp %48 : vector<8x9xf32>
    %cst_14 = arith.constant dense<0.000000e+00> : vector<8xf32>
    %50 = vector.multi_reduction <add>, %49, %cst_14 [1] : vector<8x9xf32> to vector<8xf32>
    %51 = vector.shape_cast %50 : vector<8xf32> to vector<8x1xf32>
    %52 = math.log %51 : vector<8x1xf32>
    %53 = arith.addf %46, %52 : vector<8x1xf32>
    %54 = tpu.iota {dimensions = array<i32: 1>} : vector<8x9xi32>
    %55 = vector.broadcast %5 : vector<8x1xi32> to vector<8x9xi32>
    %56 = arith.cmpi eq, %54, %55 : vector<8x9xi32>
    %cst_15 = arith.constant 0.000000e+00 : f32
    %57 = vector.broadcast %cst_15 : f32 to vector<8x9xf32>
    %58 = arith.select %56, %4, %57 : vector<8x9xi1>, vector<8x9xf32>
    %cst_16 = arith.constant dense<0.000000e+00> : vector<8xf32>
    %59 = vector.multi_reduction <add>, %58, %cst_16 [1] : vector<8x9xf32> to vector<8xf32>
    %60 = vector.shape_cast %59 : vector<8xf32> to vector<8x1xf32>
    %61 = arith.subf %53, %60 : vector<8x1xf32>
    %cst_17 = arith.constant 1.500000e+01 : f32
    %62 = vector.broadcast %cst_17 : f32 to vector<8x1xf32>
    %63 = arith.mulf %44, %62 : vector<8x1xf32>
    %cst_18 = arith.constant 0.0874999985 : f32
    %64 = vector.broadcast %cst_18 : f32 to vector<8x1xf32>
    %65 = arith.mulf %61, %64 : vector<8x1xf32>
    %66 = arith.addf %63, %65 : vector<8x1xf32>
    %67 = arith.mulf %13, %66 : vector<8x1xf32>
    %cst_19 = arith.constant dense<0.000000e+00> : vector<1xf32>
    %68 = vector.multi_reduction <add>, %67, %cst_19 [0] : vector<8x1xf32> to vector<1xf32>
    %69 = vector.shape_cast %68 : vector<1xf32> to vector<1x1xf32>
    %c0_20 = arith.constant 0 : index
    %c0_21 = arith.constant 0 : index
    %70 = vector.load %arg5[%c0_20, %c0_21] : memref<1x1xf32, #tpu.memory_space<vmem>>, vector<1x1xf32>
    %71 = arith.addf %70, %69 : vector<1x1xf32>
    %c0_22 = arith.constant 0 : index
    %c0_23 = arith.constant 0 : index
    %72 = vector.load %arg5[%c0_22, %c0_23] : memref<1x1xf32, #tpu.memory_space<vmem>>, vector<1x1xf32>
    tpu.vector_store %arg5[%c0_22, %c0_23], %71 {strides = array<i32>} : memref<1x1xf32, #tpu.memory_space<vmem>>, vector<1x1xf32>,
    %c0_i32_24 = arith.constant 0 : i32
    %73 = arith.cmpi eq, %arg0, %c0_i32_24 : i32
    %74 = arith.extui %73 : i1 to i32
    %c0_i32_25 = arith.constant 0 : i32
    %75 = arith.cmpi ne, %74, %c0_i32_25 : i32
    scf.if %75 {
      %c0_26 = arith.constant 0 : index
      %c0_27 = arith.constant 0 : index
      %76 = vector.load %arg5[%c0_26, %c0_27] : memref<1x1xf32, #tpu.memory_space<vmem>>, vector<1x1xf32>
      %c0_28 = arith.constant 0 : index
      %c0_29 = arith.constant 0 : index
      %77 = vector.load %arg4[%c0_28, %c0_29] : memref<1x1xf32, #tpu.memory_space<vmem>>, vector<1x1xf32>
      tpu.vector_store %arg4[%c0_28, %c0_29], %76 {strides = array<i32>} : memref<1x1xf32, #tpu.memory_space<vmem>>, vector<1x1xf32>,
    } else {
    }
    return
  }
  func.func @transform_0(%arg0: i32) -> (i32, i32) {
    %c0_i32 = arith.constant 0 : i32
    %c0_i32_0 = arith.constant 0 : i32
    return %arg0, %c0_i32 : i32, i32
  }
  func.func @transform_1(%arg0: i32) -> (i32, i32) {
    %c0_i32 = arith.constant 0 : i32
    %c0_i32_0 = arith.constant 0 : i32
    return %arg0, %c0_i32 : i32, i32
  }
  func.func @transform_2(%arg0: i32) -> (i32, i32) {
    %c0_i32 = arith.constant 0 : i32
    %c0_i32_0 = arith.constant 0 : i32
    return %arg0, %c0_i32 : i32, i32
  }
  func.func @transform_3(%arg0: i32) -> (i32, i32) {
    %c0_i32 = arith.constant 0 : i32
    %c0_i32_0 = arith.constant 0 : i32
    %c0_i32_1 = arith.constant 0 : i32
    return %c0_i32, %c0_i32_0 : i32, i32
  }
}

</mosaic_0001>

<llo_original>
// kernel: tpu_custom_call.1
$region0: #{tpu_custom_call.1}
  #allocation0 [shape = 'u32[]', space=smem, size = 0x4, offset = 0x4, fixed_abs, tag = 'smem constant byte address 0x4 - core index']
  #allocation1 [shape = 'u32[144,128]{1,0:T(1,128)}', space=vmem, size = 0x12000, scoped, tag = 'internal scratch']
  #allocation2 [shape = 'f32[1,1]{1,0:T(1,128)}', space=vmem, size = 0x200, scoped, tag = 'scratch operand']
  %s0 = inlined_call_operand.vmem [shape: f32[8,9], index: 0, kind: input, shape index: {}]
  %s1 = inlined_call_operand.hbm [shape: f32[8,9], index: 1, kind: input, shape index: {}]
  %s2 = inlined_call_operand.vmem [shape: s32[8,1], index: 2, kind: input, shape index: {}]
  %s3 = inlined_call_operand.hbm [shape: f32[1,1], index: 3, kind: output, shape index: {}]
  %s4 = sld [smem:[#allocation0]]
  $region34: #{tpu_custom_call.1} parent=0
    _
  %s6 = ssub.s32 1, %s4
  %s7 = scalar_select 0, %s6, %s4
  $region1: #{tpu_custom_call.1} parent=0
    #allocation3 [shape = 'u8[4096]{0}', space=vmem, size = 0x1000, scoped, tag = 'input window, operand 1, single buffered']
    #allocation4 [shape = 's32[1]{0}', space=sflag, size = 0x4, scoped, tag = 'scoped memory for tpu_custom_call.1']
    #allocation5 [shape = 's32[1]{0}', space=sflag, size = 0x4, scoped, tag = 'scoped memory for tpu_custom_call.1']
    #allocation6 [shape = 'u8[512]{0}', space=vmem, size = 0x400, scoped, tag = 'output window, operand 0, single buffered']
    %8 = vsyncpa [#allocation4], 0
    %9 = vsyncpa [#allocation5], 0
    // Predicated region
    $region2: #{tpu_custom_call.1} parent=1 // pred_check
      _
    $region3: #{tpu_custom_call.1} parent=1 // pred_check_branch
      %11 = sbr.rel (0) target = $region5
    $region4: #{tpu_custom_call.1} parent=1 // pred_region
      _
    $region5: #{tpu_custom_call.1} parent=1 // pred_fallthru
      _
    // Predicated region
    $region6: #{tpu_custom_call.1} parent=1 // pred_check
      _
    $region7: #{tpu_custom_call.1} parent=1 // pred_check_branch
      %13 = sbr.rel (0) target = $region9
    $region8: #{tpu_custom_call.1} parent=1 // pred_region
      %s15 = ssub.s32 128, 128
      %16 = vsyncadd [#allocation4], %s15
      %s18 = sshll.u32 [#allocation3], 4
      %s19 = int_to_ptr.vmem [resolvable:$true] %s18
      %21 = dma.hbm_to_vmem [thread:$0]  %s1, 128, %s19, [#allocation4]
    $region9: #{tpu_custom_call.1} parent=1 // pred_fallthru
      _
    // Predicated region
    $region10: #{tpu_custom_call.1} parent=1 // pred_check
      _
    $region11: #{tpu_custom_call.1} parent=1 // pred_check_branch
      %23 = sbr.rel (0) target = $region13
    $region12: #{tpu_custom_call.1} parent=1 // pred_region
      _
    $region13: #{tpu_custom_call.1} parent=1 // pred_fallthru
      _
    // Predicated region
    $region14: #{tpu_custom_call.1} parent=1 // pred_check
      _
    $region15: #{tpu_custom_call.1} parent=1 // pred_check_branch
      %25 = sbr.rel (0) target = $region17
    $region16: #{tpu_custom_call.1} parent=1 // pred_region
      %26 = dma.done [#allocation4], 128
    $region17: #{tpu_custom_call.1} parent=1 // pred_fallthru
      _
    %p27 = scmp.eq.s32.totalorder 0, 0
    // Predicated region
    $region18: #{tpu_custom_call.1} parent=1 // pred_check
      %p28 = pneg %p27
    $region19: #{tpu_custom_call.1} parent=1 // pred_check_branch
      %30 = sbr.rel (%p28) target = $region21
    $region20: #{tpu_custom_call.1} parent=1 // pred_region
      %vm31 = vcmask 0
      %32 = vst.msk [vmem:[#allocation2] sm:$0x1] %vm31, 0.0
    $region21: #{tpu_custom_call.1} parent=1 // pred_fallthru
      _
    %v33 = vld [vmem:[%s0] sm:$0xff]
    %v34 = vld [vmem:[#allocation3] sm:$0xff]
    %v35 = vld [vmem:[%s2] sm:$0xff]
    %s36 = smul.u32 0, 8
    %v37 = vlaneseq
    %v38 = vshrl.u32 %v37, 7
    %v39 = vstv %s36
    %v40 = vadd.s32 %v39, %v38
    %vm41 = vcmp.lt.s32.totalorder %v40, 8
    %v42 = vsel %vm41, 1, 0
    %v43 = vcvt.s32.f32 %v42
    %v44 = vmul.f32 %v33, 0.05
    %vm45 = vcmask 72704
    %v46 = vsel %vm45, %v44, -inf
    %47 = vmax.xlane.f32.xlu0 %v46
    %v48 = vpop.xlane.xlu0 %47
    %v49 = vsub.f32 %v44, %v48
    %v50 = vmul.f32 %v49, 1.442695
    %v51 = vpow.pop %v50
    %v52 = vsel %vm45, %v51, 0.0
    %53 = vadd.xlane.f32.xlu0 %v52
    %v54 = vpop.xlane.xlu0 %53
    %v55 = vlog2.pop %v54
    %v56 = vmul.f32 %v55, 0.6931472
    %v57 = vsub.f32 %v49, %v56
    %v58 = vrcp.pop %v54
    %v59 = vmul.f32 %v51, %v58
    %v60 = vmul.f32 %v34, 0.05
    %v61 = vsel %vm45, %v60, -inf
    %62 = vmax.xlane.f32.xlu0 %v61
    %v63 = vpop.xlane.xlu0 %62
    %v64 = vsub.f32 %v60, %v63
    %v65 = vmul.f32 %v64, 1.442695
    %v66 = vpow.pop %v65
    %v67 = vsel %vm45, %v66, 0.0
    %68 = vadd.xlane.f32.xlu0 %v67
    %v69 = vpop.xlane.xlu0 %68
    %v70 = vlog2.pop %v69
    %v71 = vmul.f32 %v70, 0.6931472
    %v72 = vsub.f32 %v64, %v71
    %v73 = vsub.f32 %v57, %v72
    %v74 = vmul.f32 %v59, %v73
    %v75 = vsel %vm45, %v74, 0.0
    %76 = vadd.xlane.f32.xlu0 %v75
    %v77 = vpop.xlane.xlu0 %76
    %v78 = vsel %vm45, %v34, -inf
    %79 = vmax.xlane.f32.xlu0 %v78
    %v80 = vpop.xlane.xlu0 %79
    %v81 = vsub.f32 %v34, %v80
    %v82 = vmul.f32 %v81, 1.442695
    %v83 = vpow.pop %v82
    %v84 = vsel %vm45, %v83, 0.0
    %85 = vadd.xlane.f32.xlu0 %v84
    %v86 = vpop.xlane.xlu0 %85
    %v87 = vlog2.pop %v86
    %v88 = vmul.f32 %v87, 0.6931472
    %v89 = vadd.f32 %v80, %v88
    %v90 = vlaneseq
    %v91 = vand.u32 %v90, 127
    %92 = vset.pattern.permute.xlu0 0
    %93 = vperm.xlu0 %92, %v35
    %v94 = vpop.permute.xlu0 %93
    %vm95 = vcmp.eq.s32.totalorder %v91, %v94
    %v96 = vsel %vm95, %v34, 0.0
    %v97 = vsel %vm45, %v96, 0.0
    %98 = vadd.xlane.f32.xlu0 %v97
    %v99 = vpop.xlane.xlu0 %98
    %v100 = vsub.f32 %v89, %v99
    %v101 = vmul.f32 %v77, 15.0
    %v102 = vmul.f32 %v100, 0.0875
    %v103 = vadd.f32 %v101, %v102
    %v104 = vmul.f32 %v43, %v103
    %v105 = vrot.slane %v104, 4
    %v106 = vadd.f32 %v104, %v105
    %v107 = vrot.slane %v106, 2
    %v108 = vadd.f32 %v106, %v107
    %v109 = vrot.slane %v108, 1
    %v110 = vadd.f32 %v108, %v109
    %v111 = vld [vmem:[#allocation2] sm:$0x1]
    %v112 = vadd.f32 %v111, %v110
    %vm113 = vcmask 0
    %114 = vst.msk [vmem:[#allocation2] sm:$0x1] %vm113, %v112
    // Predicated region
    $region22: #{tpu_custom_call.1} parent=1 // pred_check
      %p115 = pneg %p27
    $region23: #{tpu_custom_call.1} parent=1 // pred_check_branch
      %117 = sbr.rel (%p115) target = $region25
    $region24: #{tpu_custom_call.1} parent=1 // pred_region
      %v118 = vld [vmem:[#allocation2] sm:$0x1]
      %119 = vst.msk [vmem:[#allocation6] sm:$0x1] %vm113, %v118
    $region25: #{tpu_custom_call.1} parent=1 // pred_fallthru
      _
    // Predicated region
    $region26: #{tpu_custom_call.1} parent=1 // pred_check
      _
    $region27: #{tpu_custom_call.1} parent=1 // pred_check_branch
      %121 = sbr.rel (0) target = $region29
    $region28: #{tpu_custom_call.1} parent=1 // pred_region
      %s123 = ssub.s32 16, 16
      %124 = vsyncadd [#allocation5], %s123
      %s126 = sshll.u32 [#allocation6], 4
      %s127 = int_to_ptr.vmem [resolvable:$true] %s126
      %129 = dma.vmem_to_hbm [thread:$0]  %s127, 16, %s3, [#allocation5]
    $region29: #{tpu_custom_call.1} parent=1 // pred_fallthru
      _
    // Predicated region
    $region30: #{tpu_custom_call.1} parent=1 // pred_check
      _
    $region31: #{tpu_custom_call.1} parent=1 // pred_check_branch
      %131 = sbr.rel (0) target = $region33
    $region32: #{tpu_custom_call.1} parent=1 // pred_region
      %132 = dma.done [#allocation5], 16
    $region33: #{tpu_custom_call.1} parent=1 // pred_fallthru
      _
    %133 = vsyncpa [#allocation4], 1
    %134 = vsyncpa [#allocation5], 1

</llo_original>
